<compile_context>
chip_gen: v7x
topology: tpu7x:2x2x1
jax: 0.10.0
libtpu: 0.0.40
codegen_flags: <defaults>
</compile_context>

<pallas_src>
import jax
import jax.numpy as jnp
from jax.experimental import pallas as pl
from jax.experimental.pallas import tpu as pltpu


def _inv_sigmoid_kernel(x_ref, o_ref):
    x = x_ref[...].astype(jnp.float32)
    # logit(x) = log(x) - log1p(-x)  ==  log(x / (1 - x))
    o_ref[...] = (jnp.log(x) - jnp.log1p(-x)).astype(o_ref.dtype)


def _inv_sigmoid_jnp(x):
    xf = x.astype(jnp.float32)
    return (jnp.log(xf) - jnp.log1p(-xf)).astype(x.dtype)


def _round_up(n, m):
    return ((n + m - 1) // m) * m


def _sublane_multiple(dtype):
    """Min second-to-last tile dim: 8 for 4-byte, 16 for 2-byte, 32 for 1-byte."""
    itemsize = jnp.dtype(dtype).itemsize
    return max(8, 32 // max(itemsize, 1))


def _block_bytes_budget():
    """Per-block byte budget (in+out double-buffered => ~4x footprint in VMEM)."""
    try:
        kind = jax.devices()[0].device_kind.lower()
    except Exception:
        kind = ""
    if any(tag in kind for tag in ("v6", "v7", "7x")):
        return 4 << 20  # v6e/v7x: 32 MiB scoped default -> 16 MiB footprint OK
    return 2 << 20      # v5e (16 MiB scoped default) and unknown: stay at 2 MiB


def _inv_sigmoid_2d(x2d, block_rows, lanes, donate):
    rows = x2d.shape[0]
    grid = (pl.cdiv(rows, block_rows),)
    return pl.pallas_call(
        _inv_sigmoid_kernel,
        out_shape=jax.ShapeDtypeStruct(x2d.shape, x2d.dtype),
        grid_spec=pltpu.PrefetchScalarGridSpec(
            num_scalar_prefetch=0,
            grid=grid,
            in_specs=[pl.BlockSpec((block_rows, lanes), lambda i: (i, 0))],
            out_specs=pl.BlockSpec((block_rows, lanes), lambda i: (i, 0)),
        ),
        compiler_params=pltpu.CompilerParams(
            dimension_semantics=("parallel",),  # shards grid across v7x's 2 TCs
        ),
        input_output_aliases=({0: 0} if donate else {}),
    )(x2d)


def inv_sigmoid(x, *, donate_input=False):
    """Elementwise inverse-sigmoid log(x/(1-x)) via a Pallas TPU kernel.

    Works for any floating input shape/dtype. Values exactly 0 or 1 yield
    -inf/+inf, values outside [0, 1] yield NaN (matching torch.log(x/(1-x))).
    """
    orig_shape = x.shape
    dtype = x.dtype
    n = x.size
    if n == 0:
        return x
    flat = x.reshape(-1)

    # Widest lane count that divides n exactly -> no pad / unpad copies.
    lanes = None
    for cand in (512, 256, 128):
        if n % cand == 0:
            lanes = cand
            break
    if lanes is None:
        lanes = 512
    body_n = (n // lanes) * lanes

    if body_n == 0:
        # Fewer than 128 elements: a kernel launch isn't worth it.
        return _inv_sigmoid_jnp(flat).reshape(orig_shape)

    rows = body_n // lanes
    sub = _sublane_multiple(dtype)
    itemsize = jnp.dtype(dtype).itemsize

    if rows <= sub:
        # Full-extent block (always a legal block shape), single grid step.
        block_rows = rows
    else:
        budget_rows = max(sub, (_block_bytes_budget() // (lanes * itemsize)) // sub * sub)
        # Keep at least two grid steps so both v7x TensorCores get work.
        half_rows = _round_up(pl.cdiv(rows, 2), sub)
        block_rows = min(budget_rows, half_rows)

    body = flat if body_n == n else flat[:body_n]
    out_flat = _inv_sigmoid_2d(
        body.reshape(rows, lanes), block_rows, lanes, donate_input
    ).reshape(-1)

    if body_n != n:
        # Ragged tail (< lanes elements): negligible, do it in plain jnp.
        out_flat = jnp.concatenate([out_flat, _inv_sigmoid_jnp(flat[body_n:])])

    return out_flat.reshape(orig_shape)


if __name__ == "__main__":
    key = jax.random.PRNGKey(0)
    # Small NCHW-shaped input, values strictly inside (0, 1) so log/div are finite.
    x = jax.random.uniform(
        key, (2, 4, 16, 16), dtype=jnp.float32, minval=0.05, maxval=0.95
    )

    out = inv_sigmoid(x)
    out = jax.block_until_ready(out)

    # Reference check in plain JAX (same formula as torch.log(x / (1 - x))).
    ref = jnp.log(x / (1.0 - x))
    assert out.shape == x.shape and out.dtype == x.dtype
    assert jnp.allclose(out, ref, atol=1e-5, rtol=1e-5)

    # Also exercise a ragged (non-lane-multiple) size through the tail path.
    y = jax.random.uniform(key, (3, 5, 7), dtype=jnp.float32, minval=0.05, maxval=0.95)
    out_y = jax.block_until_ready(inv_sigmoid(y))
    assert jnp.allclose(out_y, jnp.log(y / (1.0 - y)), atol=1e-5, rtol=1e-5)

    print("KERNEL_OK")
</pallas_src>

<mosaic_0001>
module attributes {stable_mosaic.version = 11 : i64} {
  func.func @_inv_sigmoid_kernel(%arg0: i32, %arg1: memref<4x512xf32, #tpu.memory_space<vmem>>, %arg2: memref<4x512xf32, #tpu.memory_space<vmem>>) attributes {dimension_semantics = [#tpu.dimension_semantics<parallel>], iteration_bounds = array<i64: 1>, scalar_prefetch = 0 : i64, scratch_operands = 0 : i64, tpu.core_type = #tpu.core_type<tc>, window_params = [{transform_indices = @transform_0, window_bounds = array<i64: 4, 512>}, {transform_indices = @transform_1, window_bounds = array<i64: 4, 512>}]} {
    %c0 = arith.constant 0 : index
    %c0_0 = arith.constant 0 : index
    %0 = vector.load %arg1[%c0, %c0_0] : memref<4x512xf32, #tpu.memory_space<vmem>>, vector<4x512xf32>
    %1 = math.log %0 : vector<4x512xf32>
    %cst = arith.constant 0.000000e+00 : f32
    %2 = vector.broadcast %cst : f32 to vector<4x512xf32>
    %3 = arith.subf %2, %0 : vector<4x512xf32>
    %4 = math.log1p %3 : vector<4x512xf32>
    %5 = arith.subf %1, %4 : vector<4x512xf32>
    %c0_1 = arith.constant 0 : index
    %c0_2 = arith.constant 0 : index
    %6 = vector.load %arg2[%c0_1, %c0_2] : memref<4x512xf32, #tpu.memory_space<vmem>>, vector<4x512xf32>
    tpu.vector_store %arg2[%c0_1, %c0_2], %5 {strides = array<i32>} : memref<4x512xf32, #tpu.memory_space<vmem>>, vector<4x512xf32>,
    return
  }
  func.func @transform_0(%arg0: i32) -> (i32, i32) {
    %c0_i32 = arith.constant 0 : i32
    %c0_i32_0 = arith.constant 0 : i32
    return %arg0, %c0_i32 : i32, i32
  }
  func.func @transform_1(%arg0: i32) -> (i32, i32) {
    %c0_i32 = arith.constant 0 : i32
    %c0_i32_0 = arith.constant 0 : i32
    return %arg0, %c0_i32 : i32, i32
  }
}

</mosaic_0001>

<llo_original>
// kernel: tpu_custom_call.1
$region0: #{tpu_custom_call.1}
  #allocation0 [shape = 'u32[]', space=smem, size = 0x4, offset = 0x4, fixed_abs, tag = 'smem constant byte address 0x4 - core index']
  #allocation1 [shape = 'u32[144,128]{1,0:T(1,128)}', space=vmem, size = 0x12000, scoped, tag = 'internal scratch']
  %s0 = inlined_call_operand.hbm [shape: f32[4,512], index: 0, kind: input, shape index: {}]
  %s1 = inlined_call_operand.hbm [shape: f32[4,512], index: 1, kind: output, shape index: {}]
  %s2 = sld [smem:[#allocation0]]
  $region18: #{tpu_custom_call.1} parent=0
    _
  %s4 = ssub.s32 1, %s2
  %s5 = scalar_select 0, %s4, %s2
  $region1: #{tpu_custom_call.1} parent=0
    #allocation2 [shape = 'u8[8192]{0}', space=vmem, size = 0x2000, scoped, tag = 'input window, operand 0, single buffered']
    #allocation3 [shape = 's32[1]{0}', space=sflag, size = 0x4, scoped, tag = 'scoped memory for tpu_custom_call.1']
    #allocation4 [shape = 's32[1]{0}', space=sflag, size = 0x4, scoped, tag = 'scoped memory for tpu_custom_call.1']
    #allocation5 [shape = 'u8[8192]{0}', space=vmem, size = 0x2000, scoped, tag = 'output window, operand 0, single buffered']
    %6 = vsyncpa [#allocation3], 0
    %7 = vsyncpa [#allocation4], 0
    // Predicated region
    $region2: #{tpu_custom_call.1} parent=1 // pred_check
      _
    $region3: #{tpu_custom_call.1} parent=1 // pred_check_branch
      %9 = sbr.rel (0) target = $region5
    $region4: #{tpu_custom_call.1} parent=1 // pred_region
      %s11 = ssub.s32 256, 256
      %12 = vsyncadd [#allocation3], %s11
      %s14 = sshll.u32 [#allocation2], 4
      %s15 = int_to_ptr.vmem [resolvable:$true] %s14
      %17 = dma.hbm_to_vmem [thread:$0]  %s0, 256, %s15, [#allocation3]
    $region5: #{tpu_custom_call.1} parent=1 // pred_fallthru
      _
    // Predicated region
    $region6: #{tpu_custom_call.1} parent=1 // pred_check
      _
    $region7: #{tpu_custom_call.1} parent=1 // pred_check_branch
      %19 = sbr.rel (0) target = $region9
    $region8: #{tpu_custom_call.1} parent=1 // pred_region
      %20 = dma.done [#allocation3], 256
    $region9: #{tpu_custom_call.1} parent=1 // pred_fallthru
      _
    %v21 = vld [vmem:[#allocation2] sm:$0xff]
    %v22 = vld [vmem:[#allocation2 + $0x8] sm:$0xff]
    %v23 = vlog2.pop %v21
    %v24 = vmul.f32 %v23, 0.6931472
    %v25 = vlog2.pop %v22
    %v26 = vmul.f32 %v25, 0.6931472
    %v27 = vsub.f32 0.0, %v21
    %v28 = vsub.f32 0.0, %v22
    %v29 = vadd.f32 %v27, 1.0
    %v30 = vlog2.pop %v29
    %v31 = vmul.f32 %v30, 0.6931472
    %v32 = vmul.f32 -0.5, %v27
    %v33 = vadd.f32 %v32, 1.0
    %v34 = vmul.f32 %v33, %v27
    %v35 = vand.u32 2147483647, %v27
    %vm36 = vcmp.lt.f32.partialorder %v35, 0.0004427343
    %v37 = vsel %vm36, %v34, %v31
    %v38 = vadd.f32 %v28, 1.0
    %v39 = vlog2.pop %v38
    %v40 = vmul.f32 %v39, 0.6931472
    %v41 = vmul.f32 -0.5, %v28
    %v42 = vadd.f32 %v41, 1.0
    %v43 = vmul.f32 %v42, %v28
    %v44 = vand.u32 2147483647, %v28
    %vm45 = vcmp.lt.f32.partialorder %v44, 0.0004427343
    %v46 = vsel %vm45, %v43, %v40
    %v47 = vsub.f32 %v24, %v37
    %v48 = vsub.f32 %v26, %v46
    %49 = vst [vmem:[#allocation5] sm:$0xff] %v47
    %50 = vst [vmem:[#allocation5 + $0x8] sm:$0xff] %v48
    // Predicated region
    $region10: #{tpu_custom_call.1} parent=1 // pred_check
      _
    $region11: #{tpu_custom_call.1} parent=1 // pred_check_branch
      %52 = sbr.rel (0) target = $region13
    $region12: #{tpu_custom_call.1} parent=1 // pred_region
      %s54 = ssub.s32 256, 256
      %55 = vsyncadd [#allocation4], %s54
      %s57 = sshll.u32 [#allocation5], 4
      %s58 = int_to_ptr.vmem [resolvable:$true] %s57
      %60 = dma.vmem_to_hbm [thread:$0]  %s58, 256, %s1, [#allocation4]
    $region13: #{tpu_custom_call.1} parent=1 // pred_fallthru
      _
    // Predicated region
    $region14: #{tpu_custom_call.1} parent=1 // pred_check
      _
    $region15: #{tpu_custom_call.1} parent=1 // pred_check_branch
      %62 = sbr.rel (0) target = $region17
    $region16: #{tpu_custom_call.1} parent=1 // pred_region
      %63 = dma.done [#allocation4], 256
    $region17: #{tpu_custom_call.1} parent=1 // pred_fallthru
      _
    %64 = vsyncpa [#allocation3], 1
    %65 = vsyncpa [#allocation4], 1

</llo_original>
